<compile_context>
chip_gen: v7x
topology: tpu7x:2x2x1
jax: 0.10.0
libtpu: 0.0.40
codegen_flags: <defaults>
</compile_context>

<pallas_src>
import jax
import jax.numpy as jnp
import numpy as np
from jax.experimental import pallas as pl
from jax.experimental.pallas import tpu as pltpu

EPS = 1e-5


# ----------------------------------------------------------------------------
# Fused Coordinate-Attention kernel (Bt images per grid step, lane-dense H*W)
# ----------------------------------------------------------------------------
def _coord_att_kernel(x_ref, avg_ref, eh_ref, ew_ref, w1_ref, s1_ref, t1_ref,
                      wh_ref, bh_ref, ww_ref, bw_ref, o_ref):
    H = eh_ref.shape[0]
    bt = x_ref.shape[0]

    avg = avg_ref[...]            # (HW, H+W) pooling matrix (mean over W || H)
    eh = eh_ref[...]              # (H, HW)   0/1 expansion (broadcast over W)
    ew = ew_ref[...]              # (W, HW)   0/1 expansion (broadcast over H)
    w1 = w1_ref[...]              # (mid, C)  shared 1x1 conv
    s1 = s1_ref[...]              # (mid, 1)  folded BN scale
    t1 = t1_ref[...]              # (mid, 1)  folded BN shift (incl. conv1 bias)
    wh = wh_ref[...]              # (C, mid)
    bh = bh_ref[...]              # (C, 1)
    ww = ww_ref[...]              # (C, mid)
    bw = bw_ref[...]              # (C, 1)

    # bt is a small static int -> unrolled.  The heavy tensors (x, out) stay
    # lane-dense; every cross-spatial op below is an MXU matmul.
    for b in range(bt):
        x = x_ref[b].astype(jnp.float32)                              # (C, HW)

        # Directional average pooling, already concatenated in PyTorch order:
        # y[:, :H] = mean over W per row h;  y[:, H:] = mean over H per col w.
        y = jnp.dot(x, avg, preferred_element_type=jnp.float32)       # (C, H+W)

        # Shared 1x1 conv (C -> mid) on the concatenation + folded BN + h_swish.
        z = jnp.dot(w1, y, preferred_element_type=jnp.float32)        # (mid, H+W)
        z = z * s1 + t1
        z = z * (jnp.clip(z + 3.0, 0.0, 6.0) * (1.0 / 6.0))           # h_swish

        # Per-direction 1x1 convs (mid -> C) + sigmoid.
        ah = jnp.dot(wh, z[:, :H], preferred_element_type=jnp.float32) + bh  # (C, H)
        aw = jnp.dot(ww, z[:, H:], preferred_element_type=jnp.float32) + bw  # (C, W)
        # sigmoid = 1 / (1 + exp(-a)); exp runs on the EUP.  approx=True would
        # also move the divide to the EUP approx path, but costs ~1e-3 accuracy
        # on the gates, so it is kept exact (review: lowest-priority micro-opt).
        ah = pl.reciprocal(1.0 + jnp.exp(-ah), approx=False)
        aw = pl.reciprocal(1.0 + jnp.exp(-aw), approx=False)

        # Broadcast back to (C, HW) on the MXU (0/1 matrices), then one
        # lane-dense elementwise multiply and a full-width store.
        ah_full = jnp.dot(ah, eh, preferred_element_type=jnp.float32)  # (C, HW)
        aw_full = jnp.dot(aw, ew, preferred_element_type=jnp.float32)  # (C, HW)
        o_ref[b] = (x * ah_full * aw_full).astype(o_ref.dtype)


# ----------------------------------------------------------------------------
# Host-side helpers
# ----------------------------------------------------------------------------
def _pooling_and_expansion_mats(H, W):
    """Constant matrices for MXU-based pooling / broadcasting (l = h*W + w)."""
    eye_h = np.eye(H, dtype=np.float32)
    eye_w = np.eye(W, dtype=np.float32)
    pool_over_w = np.kron(eye_h, np.ones((W, 1), np.float32)) / W     # (HW, H)
    pool_over_h = np.kron(np.ones((H, 1), np.float32), eye_w) / H     # (HW, W)
    avg = np.concatenate([pool_over_w, pool_over_h], axis=1)          # (HW, H+W)
    exp_h = np.kron(eye_h, np.ones((1, W), np.float32))               # (H, HW)
    exp_w = np.kron(np.ones((1, H), np.float32), eye_w)               # (W, HW)
    return avg, exp_h, exp_w


def _pick_batch_block(B, C, HW, itemsize,
                      vmem_budget_bytes=40 * 1024 * 1024, max_bt=8):
    """Largest batch block s.t. in+out double buffers (~4 copies) fit a VMEM
    budget sized for v7x's 64 MiB, while keeping >= 2 grid steps when B >= 2
    (both v7x TensorCores / v5e-v6e megacore halves get work)."""
    per_image = C * HW * itemsize
    bt = min(B, max_bt, max(1, vmem_budget_bytes // (4 * per_image)))
    while bt > 1 and pl.cdiv(B, bt) < 2:
        bt -= 1
    while B % bt != 0:        # avoid a ragged trailing block
        bt -= 1
    return bt


def coord_att_pallas(x, params):
    """x: (B, C, H, W) float32 in the PyTorch NCHW convention."""
    B, C, H, W = x.shape
    HW = H * W
    mid = params["conv1_w"].shape[0]
    itemsize = jnp.dtype(x.dtype).itemsize

    # Lane-dense view: merge the contiguous (H, W) minor dims (free reshape).
    x_flat = x.reshape(B, C, HW)

    # Fold conv1 bias + eval-mode BatchNorm into per-channel scale / shift.
    scale = params["bn1_gamma"] / jnp.sqrt(params["bn1_var"] + EPS)
    shift = params["bn1_beta"] + scale * (params["conv1_b"] - params["bn1_mean"])

    avg_np, exp_h_np, exp_w_np = _pooling_and_expansion_mats(H, W)
    avg = jnp.asarray(avg_np)
    exp_h = jnp.asarray(exp_h_np)
    exp_w = jnp.asarray(exp_w_np)

    bt = _pick_batch_block(B, C, HW, itemsize)
    grid = (B // bt,)

    # VMEM sizing from the actual blocks: x block + out block, double buffered,
    # plus the (tiny) resident constants/weights and some compiler headroom.
    block_bytes = bt * C * HW * itemsize
    const_bytes = 4 * (avg.size + exp_h.size + exp_w.size
                       + 3 * mid * C + 2 * mid + 2 * C)
    vmem_limit_bytes = int(np.clip(4 * block_bytes + 4 * const_bytes + (4 << 20),
                                   16 << 20, 64 << 20))

    grid_spec = pltpu.PrefetchScalarGridSpec(
        num_scalar_prefetch=0,
        grid=grid,
        in_specs=[
            pl.BlockSpec((bt, C, HW), lambda i: (i, 0, 0)),   # x (lane-dense)
            pl.BlockSpec((HW, H + W), lambda i: (0, 0)),      # pooling matrix
            pl.BlockSpec((H, HW), lambda i: (0, 0)),          # expand over W
            pl.BlockSpec((W, HW), lambda i: (0, 0)),          # expand over H
            pl.BlockSpec((mid, C), lambda i: (0, 0)),         # conv1 weight
            pl.BlockSpec((mid, 1), lambda i: (0, 0)),         # folded BN scale
            pl.BlockSpec((mid, 1), lambda i: (0, 0)),         # folded BN shift
            pl.BlockSpec((C, mid), lambda i: (0, 0)),         # conv_h weight
            pl.BlockSpec((C, 1), lambda i: (0, 0)),           # conv_h bias
            pl.BlockSpec((C, mid), lambda i: (0, 0)),         # conv_w weight
            pl.BlockSpec((C, 1), lambda i: (0, 0)),           # conv_w bias
        ],
        out_specs=pl.BlockSpec((bt, C, HW), lambda i: (i, 0, 0)),
    )
    out_flat = pl.pallas_call(
        _coord_att_kernel,
        out_shape=jax.ShapeDtypeStruct((B, C, HW), x.dtype),
        grid_spec=grid_spec,
        compiler_params=pltpu.CompilerParams(
            dimension_semantics=("parallel",),
            vmem_limit_bytes=vmem_limit_bytes,
        ),
    )(x_flat, avg, exp_h, exp_w,
      params["conv1_w"], scale[:, None], shift[:, None],
      params["convh_w"], params["convh_b"][:, None],
      params["convw_w"], params["convw_b"][:, None])
    return out_flat.reshape(B, C, H, W)


# ----------------------------------------------------------------------------
# Pure-JAX reference (mirrors the PyTorch forward, eval-mode BatchNorm)
# ----------------------------------------------------------------------------
def coord_att_reference(x, p):
    B, C, H, W = x.shape
    ph = jnp.mean(x, axis=3)                                     # (B, C, H)
    pw = jnp.mean(x, axis=2)                                     # (B, C, W)
    y = jnp.concatenate([ph, pw], axis=2)                        # (B, C, H+W)
    z = jnp.einsum("bcl,mc->bml", y, p["conv1_w"]) + p["conv1_b"][None, :, None]
    z = (z - p["bn1_mean"][None, :, None]) / jnp.sqrt(p["bn1_var"][None, :, None] + EPS)
    z = z * p["bn1_gamma"][None, :, None] + p["bn1_beta"][None, :, None]
    z = z * jnp.clip(z + 3.0, 0.0, 6.0) / 6.0                    # h_swish
    zh, zw = z[:, :, :H], z[:, :, H:]
    ah = jax.nn.sigmoid(jnp.einsum("bml,cm->bcl", zh, p["convh_w"])
                        + p["convh_b"][None, :, None])           # (B, C, H)
    aw = jax.nn.sigmoid(jnp.einsum("bml,cm->bcl", zw, p["convw_w"])
                        + p["convw_b"][None, :, None])           # (B, C, W)
    return x * ah[:, :, :, None] * aw[:, :, None, :]


def make_params(key, in_channels, reduction=32):
    mid = max(8, in_channels // reduction)
    ks = jax.random.split(key, 10)
    f32 = jnp.float32
    return {
        # 1x1 conv weights stored in PyTorch (out, in) orientation
        "conv1_w": jax.random.normal(ks[0], (mid, in_channels), f32) / np.sqrt(in_channels),
        "conv1_b": jax.random.normal(ks[1], (mid,), f32) * 0.1,
        "bn1_gamma": jax.random.uniform(ks[2], (mid,), f32, 0.5, 1.5),
        "bn1_beta": jax.random.normal(ks[3], (mid,), f32) * 0.1,
        "bn1_mean": jax.random.normal(ks[4], (mid,), f32) * 0.1,
        "bn1_var": jax.random.uniform(ks[5], (mid,), f32, 0.5, 1.5),
        "convh_w": jax.random.normal(ks[6], (in_channels, mid), f32) / np.sqrt(mid),
        "convh_b": jax.random.normal(ks[7], (in_channels,), f32) * 0.1,
        "convw_w": jax.random.normal(ks[8], (in_channels, mid), f32) / np.sqrt(mid),
        "convw_b": jax.random.normal(ks[9], (in_channels,), f32) * 0.1,
    }


if __name__ == "__main__":
    B, C, H, W = 2, 32, 16, 16
    key = jax.random.PRNGKey(0)
    k_x, k_p = jax.random.split(key)
    x = jax.random.normal(k_x, (B, C, H, W), jnp.float32)
    params = make_params(k_p, C, reduction=32)

    out = jax.block_until_ready(coord_att_pallas(x, params))
    ref = jax.block_until_ready(coord_att_reference(x, params))

    err = float(jnp.max(jnp.abs(out - ref)))
    assert out.shape == (B, C, H, W)
    assert err < 1e-3, f"max abs diff vs reference: {err}"
    print("KERNEL_OK")
</pallas_src>

<mosaic_0001>
module attributes {stable_mosaic.version = 11 : i64} {
  func.func @_coord_att_kernel(%arg0: i32, %arg1: memref<1x32x256xf32, #tpu.memory_space<vmem>>, %arg2: memref<256x32xf32, #tpu.memory_space<vmem>>, %arg3: memref<16x256xf32, #tpu.memory_space<vmem>>, %arg4: memref<16x256xf32, #tpu.memory_space<vmem>>, %arg5: memref<8x32xf32, #tpu.memory_space<vmem>>, %arg6: memref<8x1xf32, #tpu.memory_space<vmem>>, %arg7: memref<8x1xf32, #tpu.memory_space<vmem>>, %arg8: memref<32x8xf32, #tpu.memory_space<vmem>>, %arg9: memref<32x1xf32, #tpu.memory_space<vmem>>, %arg10: memref<32x8xf32, #tpu.memory_space<vmem>>, %arg11: memref<32x1xf32, #tpu.memory_space<vmem>>, %arg12: memref<1x32x256xf32, #tpu.memory_space<vmem>>) attributes {dimension_semantics = [#tpu.dimension_semantics<parallel>], iteration_bounds = array<i64: 2>, scalar_prefetch = 0 : i64, scratch_operands = 0 : i64, tpu.core_type = #tpu.core_type<tc>, window_params = [{transform_indices = @transform_0, window_bounds = array<i64: 1, 32, 256>}, {pipeline_mode = #tpu.pipeline_mode<synchronous>, transform_indices = @transform_1, window_bounds = array<i64: 256, 32>}, {pipeline_mode = #tpu.pipeline_mode<synchronous>, transform_indices = @transform_2, window_bounds = array<i64: 16, 256>}, {pipeline_mode = #tpu.pipeline_mode<synchronous>, transform_indices = @transform_3, window_bounds = array<i64: 16, 256>}, {pipeline_mode = #tpu.pipeline_mode<synchronous>, transform_indices = @transform_4, window_bounds = array<i64: 8, 32>}, {pipeline_mode = #tpu.pipeline_mode<synchronous>, transform_indices = @transform_5, window_bounds = array<i64: 8, 1>}, {pipeline_mode = #tpu.pipeline_mode<synchronous>, transform_indices = @transform_6, window_bounds = array<i64: 8, 1>}, {pipeline_mode = #tpu.pipeline_mode<synchronous>, transform_indices = @transform_7, window_bounds = array<i64: 32, 8>}, {pipeline_mode = #tpu.pipeline_mode<synchronous>, transform_indices = @transform_8, window_bounds = array<i64: 32, 1>}, {pipeline_mode = #tpu.pipeline_mode<synchronous>, transform_indices = @transform_9, window_bounds = array<i64: 32, 8>}, {pipeline_mode = #tpu.pipeline_mode<synchronous>, transform_indices = @transform_10, window_bounds = array<i64: 32, 1>}, {transform_indices = @transform_11, window_bounds = array<i64: 1, 32, 256>}]} {
    %c0 = arith.constant 0 : index
    %c0_0 = arith.constant 0 : index
    %0 = vector.load %arg2[%c0, %c0_0] : memref<256x32xf32, #tpu.memory_space<vmem>>, vector<256x32xf32>
    %c0_1 = arith.constant 0 : index
    %c0_2 = arith.constant 0 : index
    %1 = vector.load %arg3[%c0_1, %c0_2] : memref<16x256xf32, #tpu.memory_space<vmem>>, vector<16x256xf32>
    %c0_3 = arith.constant 0 : index
    %c0_4 = arith.constant 0 : index
    %2 = vector.load %arg4[%c0_3, %c0_4] : memref<16x256xf32, #tpu.memory_space<vmem>>, vector<16x256xf32>
    %c0_5 = arith.constant 0 : index
    %c0_6 = arith.constant 0 : index
    %3 = vector.load %arg5[%c0_5, %c0_6] : memref<8x32xf32, #tpu.memory_space<vmem>>, vector<8x32xf32>
    %c0_7 = arith.constant 0 : index
    %c0_8 = arith.constant 0 : index
    %4 = vector.load %arg6[%c0_7, %c0_8] : memref<8x1xf32, #tpu.memory_space<vmem>>, vector<8x1xf32>
    %c0_9 = arith.constant 0 : index
    %c0_10 = arith.constant 0 : index
    %5 = vector.load %arg7[%c0_9, %c0_10] : memref<8x1xf32, #tpu.memory_space<vmem>>, vector<8x1xf32>
    %c0_11 = arith.constant 0 : index
    %c0_12 = arith.constant 0 : index
    %6 = vector.load %arg8[%c0_11, %c0_12] : memref<32x8xf32, #tpu.memory_space<vmem>>, vector<32x8xf32>
    %c0_13 = arith.constant 0 : index
    %c0_14 = arith.constant 0 : index
    %7 = vector.load %arg9[%c0_13, %c0_14] : memref<32x1xf32, #tpu.memory_space<vmem>>, vector<32x1xf32>
    %c0_15 = arith.constant 0 : index
    %c0_16 = arith.constant 0 : index
    %8 = vector.load %arg10[%c0_15, %c0_16] : memref<32x8xf32, #tpu.memory_space<vmem>>, vector<32x8xf32>
    %c0_17 = arith.constant 0 : index
    %c0_18 = arith.constant 0 : index
    %9 = vector.load %arg11[%c0_17, %c0_18] : memref<32x1xf32, #tpu.memory_space<vmem>>, vector<32x1xf32>
    %c0_19 = arith.constant 0 : index
    %c0_20 = arith.constant 0 : index
    %c0_21 = arith.constant 0 : index
    %10 = vector.load %arg1[%c0_19, %c0_20, %c0_21] : memref<1x32x256xf32, #tpu.memory_space<vmem>>, vector<1x32x256xf32>
    %11 = vector.shape_cast %10 : vector<1x32x256xf32> to vector<32x256xf32>
    %cst = arith.constant dense<0.000000e+00> : vector<32x32xf32>
    %12 = tpu.matmul %11, %0, %cst {dimension_numbers = #tpu.dot_dimension_numbers<[1], [0], [0], [1], [0, 0, 1, 1], [], []>} : vector<32x256xf32>, vector<256x32xf32>, vector<32x32xf32> -> vector<32x32xf32>
    %cst_22 = arith.constant dense<0.000000e+00> : vector<8x32xf32>
    %13 = tpu.matmul %3, %12, %cst_22 {dimension_numbers = #tpu.dot_dimension_numbers<[1], [0], [0], [1], [0, 0, 1, 1], [], []>} : vector<8x32xf32>, vector<32x32xf32>, vector<8x32xf32> -> vector<8x32xf32>
    %14 = vector.broadcast %4 : vector<8x1xf32> to vector<8x32xf32>
    %15 = arith.mulf %13, %14 : vector<8x32xf32>
    %16 = vector.broadcast %5 : vector<8x1xf32> to vector<8x32xf32>
    %17 = arith.addf %15, %16 : vector<8x32xf32>
    %cst_23 = arith.constant 3.000000e+00 : f32
    %18 = vector.broadcast %cst_23 : f32 to vector<8x32xf32>
    %19 = arith.addf %17, %18 : vector<8x32xf32>
    %cst_24 = arith.constant 0.000000e+00 : f32
    %cst_25 = arith.constant 6.000000e+00 : f32
    %20 = vector.broadcast %cst_24 : f32 to vector<8x32xf32>
    %21 = arith.maximumf %20, %19 : vector<8x32xf32>
    %22 = vector.broadcast %cst_25 : f32 to vector<8x32xf32>
    %23 = arith.minimumf %22, %21 : vector<8x32xf32>
    %cst_26 = arith.constant 0.166666672 : f32
    %24 = vector.broadcast %cst_26 : f32 to vector<8x32xf32>
    %25 = arith.mulf %23, %24 : vector<8x32xf32>
    %26 = arith.mulf %17, %25 : vector<8x32xf32>
    %27 = vector.extract_strided_slice %26 {offsets = [0, 0], sizes = [8, 16], strides = [1, 1]} : vector<8x32xf32> to vector<8x16xf32>
    %cst_27 = arith.constant dense<0.000000e+00> : vector<32x16xf32>
    %28 = tpu.matmul %6, %27, %cst_27 {dimension_numbers = #tpu.dot_dimension_numbers<[1], [0], [0], [1], [0, 0, 1, 1], [], []>} : vector<32x8xf32>, vector<8x16xf32>, vector<32x16xf32> -> vector<32x16xf32>
    %29 = vector.broadcast %7 : vector<32x1xf32> to vector<32x16xf32>
    %30 = arith.addf %28, %29 : vector<32x16xf32>
    %31 = vector.extract_strided_slice %26 {offsets = [0, 16], sizes = [8, 16], strides = [1, 1]} : vector<8x32xf32> to vector<8x16xf32>
    %cst_28 = arith.constant dense<0.000000e+00> : vector<32x16xf32>
    %32 = tpu.matmul %8, %31, %cst_28 {dimension_numbers = #tpu.dot_dimension_numbers<[1], [0], [0], [1], [0, 0, 1, 1], [], []>} : vector<32x8xf32>, vector<8x16xf32>, vector<32x16xf32> -> vector<32x16xf32>
    %33 = vector.broadcast %9 : vector<32x1xf32> to vector<32x16xf32>
    %34 = arith.addf %32, %33 : vector<32x16xf32>
    %cst_29 = arith.constant 0.000000e+00 : f32
    %35 = vector.broadcast %cst_29 : f32 to vector<32x16xf32>
    %36 = arith.subf %35, %30 : vector<32x16xf32>
    %37 = math.exp %36 : vector<32x16xf32>
    %cst_30 = arith.constant 1.000000e+00 : f32
    %38 = vector.broadcast %cst_30 : f32 to vector<32x16xf32>
    %39 = arith.addf %38, %37 : vector<32x16xf32>
    %40 = tpu.reciprocal %39 : vector<32x16xf32> -> vector<32x16xf32>
    %cst_31 = arith.constant 0.000000e+00 : f32
    %41 = vector.broadcast %cst_31 : f32 to vector<32x16xf32>
    %42 = arith.subf %41, %34 : vector<32x16xf32>
    %43 = math.exp %42 : vector<32x16xf32>
    %cst_32 = arith.constant 1.000000e+00 : f32
    %44 = vector.broadcast %cst_32 : f32 to vector<32x16xf32>
    %45 = arith.addf %44, %43 : vector<32x16xf32>
    %46 = tpu.reciprocal %45 : vector<32x16xf32> -> vector<32x16xf32>
    %cst_33 = arith.constant dense<0.000000e+00> : vector<32x256xf32>
    %47 = tpu.matmul %40, %1, %cst_33 {dimension_numbers = #tpu.dot_dimension_numbers<[1], [0], [0], [1], [0, 0, 1, 1], [], []>} : vector<32x16xf32>, vector<16x256xf32>, vector<32x256xf32> -> vector<32x256xf32>
    %cst_34 = arith.constant dense<0.000000e+00> : vector<32x256xf32>
    %48 = tpu.matmul %46, %2, %cst_34 {dimension_numbers = #tpu.dot_dimension_numbers<[1], [0], [0], [1], [0, 0, 1, 1], [], []>} : vector<32x16xf32>, vector<16x256xf32>, vector<32x256xf32> -> vector<32x256xf32>
    %49 = arith.mulf %11, %47 : vector<32x256xf32>
    %50 = arith.mulf %49, %48 : vector<32x256xf32>
    %c0_35 = arith.constant 0 : index
    %c0_36 = arith.constant 0 : index
    %c0_37 = arith.constant 0 : index
    %51 = vector.load %arg12[%c0_35, %c0_36, %c0_37] : memref<1x32x256xf32, #tpu.memory_space<vmem>>, vector<1x32x256xf32>
    %52 = vector.shape_cast %51 : vector<1x32x256xf32> to vector<32x256xf32>
    %53 = vector.shape_cast %50 : vector<32x256xf32> to vector<1x32x256xf32>
    tpu.vector_store %arg12[%c0_35, %c0_36, %c0_37], %53 {strides = array<i32>} : memref<1x32x256xf32, #tpu.memory_space<vmem>>, vector<1x32x256xf32>,
    return
  }
  func.func @transform_0(%arg0: i32) -> (i32, i32, i32) {
    %c0_i32 = arith.constant 0 : i32
    %c0_i32_0 = arith.constant 0 : i32
    %c0_i32_1 = arith.constant 0 : i32
    return %arg0, %c0_i32, %c0_i32_0 : i32, i32, i32
  }
  func.func @transform_1(%arg0: i32) -> (i32, i32) {
    %c0_i32 = arith.constant 0 : i32
    %c0_i32_0 = arith.constant 0 : i32
    %c0_i32_1 = arith.constant 0 : i32
    return %c0_i32, %c0_i32_0 : i32, i32
  }
  func.func @transform_2(%arg0: i32) -> (i32, i32) {
    %c0_i32 = arith.constant 0 : i32
    %c0_i32_0 = arith.constant 0 : i32
    %c0_i32_1 = arith.constant 0 : i32
    return %c0_i32, %c0_i32_0 : i32, i32
  }
  func.func @transform_3(%arg0: i32) -> (i32, i32) {
    %c0_i32 = arith.constant 0 : i32
    %c0_i32_0 = arith.constant 0 : i32
    %c0_i32_1 = arith.constant 0 : i32
    return %c0_i32, %c0_i32_0 : i32, i32
  }
  func.func @transform_4(%arg0: i32) -> (i32, i32) {
    %c0_i32 = arith.constant 0 : i32
    %c0_i32_0 = arith.constant 0 : i32
    %c0_i32_1 = arith.constant 0 : i32
    return %c0_i32, %c0_i32_0 : i32, i32
  }
  func.func @transform_5(%arg0: i32) -> (i32, i32) {
    %c0_i32 = arith.constant 0 : i32
    %c0_i32_0 = arith.constant 0 : i32
    %c0_i32_1 = arith.constant 0 : i32
    return %c0_i32, %c0_i32_0 : i32, i32
  }
  func.func @transform_6(%arg0: i32) -> (i32, i32) {
    %c0_i32 = arith.constant 0 : i32
    %c0_i32_0 = arith.constant 0 : i32
    %c0_i32_1 = arith.constant 0 : i32
    return %c0_i32, %c0_i32_0 : i32, i32
  }
  func.func @transform_7(%arg0: i32) -> (i32, i32) {
    %c0_i32 = arith.constant 0 : i32
    %c0_i32_0 = arith.constant 0 : i32
    %c0_i32_1 = arith.constant 0 : i32
    return %c0_i32, %c0_i32_0 : i32, i32
  }
  func.func @transform_8(%arg0: i32) -> (i32, i32) {
    %c0_i32 = arith.constant 0 : i32
    %c0_i32_0 = arith.constant 0 : i32
    %c0_i32_1 = arith.constant 0 : i32
    return %c0_i32, %c0_i32_0 : i32, i32
  }
  func.func @transform_9(%arg0: i32) -> (i32, i32) {
    %c0_i32 = arith.constant 0 : i32
    %c0_i32_0 = arith.constant 0 : i32
    %c0_i32_1 = arith.constant 0 : i32
    return %c0_i32, %c0_i32_0 : i32, i32
  }
  func.func @transform_10(%arg0: i32) -> (i32, i32) {
    %c0_i32 = arith.constant 0 : i32
    %c0_i32_0 = arith.constant 0 : i32
    %c0_i32_1 = arith.constant 0 : i32
    return %c0_i32, %c0_i32_0 : i32, i32
  }
  func.func @transform_11(%arg0: i32) -> (i32, i32, i32) {
    %c0_i32 = arith.constant 0 : i32
    %c0_i32_0 = arith.constant 0 : i32
    %c0_i32_1 = arith.constant 0 : i32
    return %arg0, %c0_i32, %c0_i32_0 : i32, i32, i32
  }
}

</mosaic_0001>

<llo_original>
// kernel: tpu_custom_call.1
$region0: #{tpu_custom_call.1}
  #allocation0 [shape = 'u32[]', space=smem, size = 0x4, offset = 0x4, fixed_abs, tag = 'smem constant byte address 0x4 - core index']
  #allocation1 [shape = 'u32[144,128]{1,0:T(1,128)}', space=vmem, size = 0x12000, scoped, tag = 'internal scratch']
  %s0 = inlined_call_operand.vmem [shape: f32[2,32,256], index: 0, kind: input, shape index: {}]
  %s1 = inlined_call_operand.vmem [shape: f32[256,32], index: 1, kind: input, shape index: {}]
  %s2 = inlined_call_operand.vmem [shape: f32[16,256], index: 2, kind: input, shape index: {}]
  %s3 = inlined_call_operand.vmem [shape: f32[16,256], index: 3, kind: input, shape index: {}]
  %s4 = inlined_call_operand.vmem [shape: f32[8,32], index: 4, kind: input, shape index: {}]
  %s5 = inlined_call_operand.vmem [shape: f32[8,1], index: 5, kind: input, shape index: {}]
  %s6 = inlined_call_operand.vmem [shape: f32[8,1], index: 6, kind: input, shape index: {}]
  %s7 = inlined_call_operand.vmem [shape: f32[32,8], index: 7, kind: input, shape index: {}]
  %s8 = inlined_call_operand.vmem [shape: f32[32,1], index: 8, kind: input, shape index: {}]
  %s9 = inlined_call_operand.vmem [shape: f32[32,8], index: 9, kind: input, shape index: {}]
  %s10 = inlined_call_operand.vmem [shape: f32[32,1], index: 10, kind: input, shape index: {}]
  %s11 = inlined_call_operand.hbm [shape: f32[2,32,256], index: 11, kind: output, shape index: {}]
  %s12 = sld [smem:[#allocation0]]
  $region77: #{tpu_custom_call.1} parent=0
    _
  %s14 = ssub.s32 1, %s12
  %s15 = scalar_select 0, %s14, %s12
  $region1: #{tpu_custom_call.1} parent=0
    #allocation2 [shape = 'u8[65536]{0}', space=vmem, size = 0x10000, scoped, tag = 'output window, operand 0']
    #allocation3 [shape = 's32[2]{0}', space=sflag, size = 0x8, scoped, tag = 'scoped memory for tpu_custom_call.1']
    %16 = vsyncpa [#allocation3], 0
    %s17 = scalar_lea.sflag [#allocation3], 1
    %18 = vsyncpa %s17, 0
    loop: start=0, step=1, limit=4
    $region2: #{tpu_custom_call.1} parent=1 // loop_pre_header
      _
    $region3: #{tpu_custom_call.1} parent=1 // loop_header
      %s20 = sphi 0, %s24
      %p21 = scmp.ge.s32.totalorder %s20, 4
      %s30 = sphi 0, %s32
      %s33 = sphi 0, %s30
      %s34 = sphi 0, %s33
      %s50 = sphi 0, %s34
      %s54 = sphi 0, %s54
      %s56 = sphi 0, %s54
      %s57 = sphi 0, %s56
      %s71 = sphi 0, %s57
      %s75 = sphi 0, %s75
      %s77 = sphi 0, %s75
      %s78 = sphi 0, %s77
      %s92 = sphi 0, %s78
      %s96 = sphi 0, %s96
      %s98 = sphi 0, %s96
      %s99 = sphi 0, %s98
      %s113 = sphi 0, %s99
      %s117 = sphi 0, %s117
      %s119 = sphi 0, %s117
      %s120 = sphi 0, %s119
      %s134 = sphi 0, %s120
      %s138 = sphi 0, %s138
      %s140 = sphi 0, %s138
      %s141 = sphi 0, %s140
      %s155 = sphi 0, %s141
      %s159 = sphi 0, %s159
      %s161 = sphi 0, %s159
      %s162 = sphi 0, %s161
      %s176 = sphi 0, %s162
      %s180 = sphi 0, %s180
      %s182 = sphi 0, %s180
      %s183 = sphi 0, %s182
      %s197 = sphi 0, %s183
      %s201 = sphi 0, %s201
      %s203 = sphi 0, %s201
      %s204 = sphi 0, %s203
      %s218 = sphi 0, %s204
      %s222 = sphi 0, %s222
      %s224 = sphi 0, %s222
      %s225 = sphi 0, %s224
      %s239 = sphi 0, %s225
      %s243 = sphi 0, %s243
      %s245 = sphi 0, %s243
      %s246 = sphi 0, %s245
      %s260 = sphi 0, %s246
      %s266 = sphi 0, %s268
      %s269 = sphi 0, %s266
      %s270 = sphi 0, %s269
      %s286 = sphi 0, %s270
    $region4: #{tpu_custom_call.1} parent=1 // loop_header_branch
      %23 = sbr.rel (%p21) target = $region8
    $region5: #{tpu_custom_call.1} parent=1 // loop_body
      %s25 = ssub.s32 %s20, 1
      %s26 = ssub.s32 %s20, 2
      %s27 = sadd.s32 %s20, 1
      %s28 = ssub.s32 %s20, %s27
      %p29 = scmp.eq.s32.totalorder %s28, 0
      %s31 = sadd.s32 %s30, 1
      %s32 = scalar_select %p29, %s30, %s31
      %p35 = pneg %p29
      %p36 = scmp.eq.s32.totalorder %s20, 1
      %p37 = por %p35, %p36
      %p38 = scmp.ne.s32.totalorder %s30, %s33
      %p39 = scmp.eq.s32.totalorder %s20, 0
      %p40 = por %p38, %p39
      %p41 = scmp.ne.s32.totalorder %s30, %s33
      %p42 = scmp.eq.s32.totalorder %s25, 1
      %p43 = por %p41, %p42
      %p44 = scmp.ne.s32.totalorder %s33, %s34
      %p45 = scmp.eq.s32.totalorder %s25, 0
      %p46 = por %p44, %p45
      %p47 = scmp.ne.s32.totalorder %s33, %s34
      %p48 = scmp.eq.s32.totalorder %s26, 1
      %p49 = por %p47, %p48
      %p51 = scmp.ne.s32.totalorder %s34, %s50
      %p52 = scmp.eq.s32.totalorder %s26, 0
      %p53 = por %p51, %p52
      %s55 = sadd.s32 %s54, 1
      %p58 = scmp.eq.s32.totalorder %s20, 1
      %p59 = scmp.ne.s32.totalorder %s54, %s56
      %p60 = scmp.eq.s32.totalorder %s20, 0
      %p61 = por %p59, %p60
      %p62 = scmp.ne.s32.totalorder %s54, %s56
      %p63 = scmp.eq.s32.totalorder %s25, 1
      %p64 = por %p62, %p63
      %p65 = scmp.ne.s32.totalorder %s56, %s57
      %p66 = scmp.eq.s32.totalorder %s25, 0
      %p67 = por %p65, %p66
      %p68 = scmp.ne.s32.totalorder %s56, %s57
      %p69 = scmp.eq.s32.totalorder %s26, 1
      %p70 = por %p68, %p69
      %p72 = scmp.ne.s32.totalorder %s57, %s71
      %p73 = scmp.eq.s32.totalorder %s26, 0
      %p74 = por %p72, %p73
      %s76 = sadd.s32 %s75, 1
      %p79 = scmp.eq.s32.totalorder %s20, 1
      %p80 = scmp.ne.s32.totalorder %s75, %s77
      %p81 = scmp.eq.s32.totalorder %s20, 0
      %p82 = por %p80, %p81
      %p83 = scmp.ne.s32.totalorder %s75, %s77
      %p84 = scmp.eq.s32.totalorder %s25, 1
      %p85 = por %p83, %p84
      %p86 = scmp.ne.s32.totalorder %s77, %s78
      %p87 = scmp.eq.s32.totalorder %s25, 0
      %p88 = por %p86, %p87
      %p89 = scmp.ne.s32.totalorder %s77, %s78
      %p90 = scmp.eq.s32.totalorder %s26, 1
      %p91 = por %p89, %p90
      %p93 = scmp.ne.s32.totalorder %s78, %s92
      %p94 = scmp.eq.s32.totalorder %s26, 0
      %p95 = por %p93, %p94
      %s97 = sadd.s32 %s96, 1
      %p100 = scmp.eq.s32.totalorder %s20, 1
      %p101 = scmp.ne.s32.totalorder %s96, %s98
      %p102 = scmp.eq.s32.totalorder %s20, 0
      %p103 = por %p101, %p102
      %p104 = scmp.ne.s32.totalorder %s96, %s98
      %p105 = scmp.eq.s32.totalorder %s25, 1
      %p106 = por %p104, %p105
      %p107 = scmp.ne.s32.totalorder %s98, %s99
      %p108 = scmp.eq.s32.totalorder %s25, 0
      %p109 = por %p107, %p108
      %p110 = scmp.ne.s32.totalorder %s98, %s99
      %p111 = scmp.eq.s32.totalorder %s26, 1
      %p112 = por %p110, %p111
      %p114 = scmp.ne.s32.totalorder %s99, %s113
      %p115 = scmp.eq.s32.totalorder %s26, 0
      %p116 = por %p114, %p115
      %s118 = sadd.s32 %s117, 1
      %p121 = scmp.eq.s32.totalorder %s20, 1
      %p122 = scmp.ne.s32.totalorder %s117, %s119
      %p123 = scmp.eq.s32.totalorder %s20, 0
      %p124 = por %p122, %p123
      %p125 = scmp.ne.s32.totalorder %s117, %s119
      %p126 = scmp.eq.s32.totalorder %s25, 1
      %p127 = por %p125, %p126
      %p128 = scmp.ne.s32.totalorder %s119, %s120
      %p129 = scmp.eq.s32.totalorder %s25, 0
      %p130 = por %p128, %p129
      %p131 = scmp.ne.s32.totalorder %s119, %s120
      %p132 = scmp.eq.s32.totalorder %s26, 1
      %p133 = por %p131, %p132
      %p135 = scmp.ne.s32.totalorder %s120, %s134
      %p136 = scmp.eq.s32.totalorder %s26, 0
      %p137 = por %p135, %p136
      %s139 = sadd.s32 %s138, 1
      %p142 = scmp.eq.s32.totalorder %s20, 1
      %p143 = scmp.ne.s32.totalorder %s138, %s140
      %p144 = scmp.eq.s32.totalorder %s20, 0
      %p145 = por %p143, %p144
      %p146 = scmp.ne.s32.totalorder %s138, %s140
      %p147 = scmp.eq.s32.totalorder %s25, 1
      %p148 = por %p146, %p147
      %p149 = scmp.ne.s32.totalorder %s140, %s141
      %p150 = scmp.eq.s32.totalorder %s25, 0
      %p151 = por %p149, %p150
      %p152 = scmp.ne.s32.totalorder %s140, %s141
      %p153 = scmp.eq.s32.totalorder %s26, 1
      %p154 = por %p152, %p153
      %p156 = scmp.ne.s32.totalorder %s141, %s155
      %p157 = scmp.eq.s32.totalorder %s26, 0
      %p158 = por %p156, %p157
      %s160 = sadd.s32 %s159, 1
      %p163 = scmp.eq.s32.totalorder %s20, 1
      %p164 = scmp.ne.s32.totalorder %s159, %s161
      %p165 = scmp.eq.s32.totalorder %s20, 0
      %p166 = por %p164, %p165
      %p167 = scmp.ne.s32.totalorder %s159, %s161
      %p168 = scmp.eq.s32.totalorder %s25, 1
      %p169 = por %p167, %p168
      %p170 = scmp.ne.s32.totalorder %s161, %s162
      %p171 = scmp.eq.s32.totalorder %s25, 0
      %p172 = por %p170, %p171
      %p173 = scmp.ne.s32.totalorder %s161, %s162
      %p174 = scmp.eq.s32.totalorder %s26, 1
      %p175 = por %p173, %p174
      %p177 = scmp.ne.s32.totalorder %s162, %s176
      %p178 = scmp.eq.s32.totalorder %s26, 0
      %p179 = por %p177, %p178
      %s181 = sadd.s32 %s180, 1
      %p184 = scmp.eq.s32.totalorder %s20, 1
      %p185 = scmp.ne.s32.totalorder %s180, %s182
      %p186 = scmp.eq.s32.totalorder %s20, 0
      %p187 = por %p185, %p186
      %p188 = scmp.ne.s32.totalorder %s180, %s182
      %p189 = scmp.eq.s32.totalorder %s25, 1
      %p190 = por %p188, %p189
      %p191 = scmp.ne.s32.totalorder %s182, %s183
      %p192 = scmp.eq.s32.totalorder %s25, 0
      %p193 = por %p191, %p192
      %p194 = scmp.ne.s32.totalorder %s182, %s183
      %p195 = scmp.eq.s32.totalorder %s26, 1
      %p196 = por %p194, %p195
      %p198 = scmp.ne.s32.totalorder %s183, %s197
      %p199 = scmp.eq.s32.totalorder %s26, 0
      %p200 = por %p198, %p199
      %s202 = sadd.s32 %s201, 1
      %p205 = scmp.eq.s32.totalorder %s20, 1
      %p206 = scmp.ne.s32.totalorder %s201, %s203
      %p207 = scmp.eq.s32.totalorder %s20, 0
      %p208 = por %p206, %p207
      %p209 = scmp.ne.s32.totalorder %s201, %s203
      %p210 = scmp.eq.s32.totalorder %s25, 1
      %p211 = por %p209, %p210
      %p212 = scmp.ne.s32.totalorder %s203, %s204
      %p213 = scmp.eq.s32.totalorder %s25, 0
      %p214 = por %p212, %p213
      %p215 = scmp.ne.s32.totalorder %s203, %s204
      %p216 = scmp.eq.s32.totalorder %s26, 1
      %p217 = por %p215, %p216
      %p219 = scmp.ne.s32.totalorder %s204, %s218
      %p220 = scmp.eq.s32.totalorder %s26, 0
      %p221 = por %p219, %p220
      %s223 = sadd.s32 %s222, 1
      %p226 = scmp.eq.s32.totalorder %s20, 1
      %p227 = scmp.ne.s32.totalorder %s222, %s224
      %p228 = scmp.eq.s32.totalorder %s20, 0
      %p229 = por %p227, %p228
      %p230 = scmp.ne.s32.totalorder %s222, %s224
      %p231 = scmp.eq.s32.totalorder %s25, 1
      %p232 = por %p230, %p231
      %p233 = scmp.ne.s32.totalorder %s224, %s225
      %p234 = scmp.eq.s32.totalorder %s25, 0
      %p235 = por %p233, %p234
      %p236 = scmp.ne.s32.totalorder %s224, %s225
      %p237 = scmp.eq.s32.totalorder %s26, 1
      %p238 = por %p236, %p237
      %p240 = scmp.ne.s32.totalorder %s225, %s239
      %p241 = scmp.eq.s32.totalorder %s26, 0
      %p242 = por %p240, %p241
      %s244 = sadd.s32 %s243, 1
      %p247 = scmp.eq.s32.totalorder %s20, 1
      %p248 = scmp.ne.s32.totalorder %s243, %s245
      %p249 = scmp.eq.s32.totalorder %s20, 0
      %p250 = por %p248, %p249
      %p251 = scmp.ne.s32.totalorder %s243, %s245
      %p252 = scmp.eq.s32.totalorder %s25, 1
      %p253 = por %p251, %p252
      %p254 = scmp.ne.s32.totalorder %s245, %s246
      %p255 = scmp.eq.s32.totalorder %s25, 0
      %p256 = por %p254, %p255
      %p257 = scmp.ne.s32.totalorder %s245, %s246
      %p258 = scmp.eq.s32.totalorder %s26, 1
      %p259 = por %p257, %p258
      %p261 = scmp.ne.s32.totalorder %s246, %s260
      %p262 = scmp.eq.s32.totalorder %s26, 0
      %p263 = por %p261, %p262
      %s264 = ssub.s32 %s20, %s27
      %p265 = scmp.eq.s32.totalorder %s264, 0
      %s267 = sadd.s32 %s266, 1
      %s268 = scalar_select %p265, %s266, %s267
      %p271 = pneg %p265
      %p272 = scmp.eq.s32.totalorder %s20, 1
      %p273 = por %p271, %p272
      %p274 = scmp.ne.s32.totalorder %s266, %s269
      %p275 = scmp.eq.s32.totalorder %s20, 0
      %p276 = por %p274, %p275
      %p277 = scmp.ne.s32.totalorder %s266, %s269
      %p278 = scmp.eq.s32.totalorder %s25, 1
      %p279 = por %p277, %p278
      %p280 = scmp.ne.s32.totalorder %s269, %s270
      %p281 = scmp.eq.s32.totalorder %s25, 0
      %p282 = por %p280, %p281
      %p283 = scmp.ne.s32.totalorder %s269, %s270
      %p284 = scmp.eq.s32.totalorder %s26, 1
      %p285 = por %p283, %p284
      %p287 = scmp.ne.s32.totalorder %s270, %s286
      %p288 = scmp.eq.s32.totalorder %s26, 0
      %p289 = por %p287, %p288
      %p290 = scmp.le.s32.totalorder 1, %s20
      %p291 = scmp.lt.s32.totalorder %s20, 3
      %p292 = pnand %p290, %p291
      %p293 = pneg %p292
      // Predicated region
      $region9: #{tpu_custom_call.1} parent=5 // pred_check
        _
      $region10: #{tpu_custom_call.1} parent=5 // pred_check_branch
        %295 = sbr.rel (%p292) target = $region12
      $region11: #{tpu_custom_call.1} parent=5 // pred_region
        %s296 = ssub.s32 %s20, 1
        // Predicated region
        $region13: #{tpu_custom_call.1} parent=11 // pred_check
          %p297 = pneg %p67
        $region14: #{tpu_custom_call.1} parent=11 // pred_check_branch
          %299 = sbr.rel (%p297) target = $region16
        $region15: #{tpu_custom_call.1} parent=11 // pred_region
          _
        $region16: #{tpu_custom_call.1} parent=11 // pred_fallthru
          _
        // Predicated region
        $region17: #{tpu_custom_call.1} parent=11 // pred_check
          %p300 = pneg %p88
        $region18: #{tpu_custom_call.1} parent=11 // pred_check_branch
          %302 = sbr.rel (%p300) target = $region20
        $region19: #{tpu_custom_call.1} parent=11 // pred_region
          _
        $region20: #{tpu_custom_call.1} parent=11 // pred_fallthru
          _
        // Predicated region
        $region21: #{tpu_custom_call.1} parent=11 // pred_check
          %p303 = pneg %p109
        $region22: #{tpu_custom_call.1} parent=11 // pred_check_branch
          %305 = sbr.rel (%p303) target = $region24
        $region23: #{tpu_custom_call.1} parent=11 // pred_region
          _
        $region24: #{tpu_custom_call.1} parent=11 // pred_fallthru
          _
        // Predicated region
        $region25: #{tpu_custom_call.1} parent=11 // pred_check
          %p306 = pneg %p130
        $region26: #{tpu_custom_call.1} parent=11 // pred_check_branch
          %308 = sbr.rel (%p306) target = $region28
        $region27: #{tpu_custom_call.1} parent=11 // pred_region
          _
        $region28: #{tpu_custom_call.1} parent=11 // pred_fallthru
          _
        // Predicated region
        $region29: #{tpu_custom_call.1} parent=11 // pred_check
          %p309 = pneg %p151
        $region30: #{tpu_custom_call.1} parent=11 // pred_check_branch
          %311 = sbr.rel (%p309) target = $region32
        $region31: #{tpu_custom_call.1} parent=11 // pred_region
          _
        $region32: #{tpu_custom_call.1} parent=11 // pred_fallthru
          _
        // Predicated region
        $region33: #{tpu_custom_call.1} parent=11 // pred_check
          %p312 = pneg %p172
        $region34: #{tpu_custom_call.1} parent=11 // pred_check_branch
          %314 = sbr.rel (%p312) target = $region36
        $region35: #{tpu_custom_call.1} parent=11 // pred_region
          _
        $region36: #{tpu_custom_call.1} parent=11 // pred_fallthru
          _
        // Predicated region
        $region37: #{tpu_custom_call.1} parent=11 // pred_check
          %p315 = pneg %p193
        $region38: #{tpu_custom_call.1} parent=11 // pred_check_branch
          %317 = sbr.rel (%p315) target = $region40
        $region39: #{tpu_custom_call.1} parent=11 // pred_region
          _
        $region40: #{tpu_custom_call.1} parent=11 // pred_fallthru
          _
        // Predicated region
        $region41: #{tpu_custom_call.1} parent=11 // pred_check
          %p318 = pneg %p214
        $region42: #{tpu_custom_call.1} parent=11 // pred_check_branch
          %320 = sbr.rel (%p318) target = $region44
        $region43: #{tpu_custom_call.1} parent=11 // pred_region
          _
        $region44: #{tpu_custom_call.1} parent=11 // pred_fallthru
          _
        // Predicated region
        $region45: #{tpu_custom_call.1} parent=11 // pred_check
          %p321 = pneg %p235
        $region46: #{tpu_custom_call.1} parent=11 // pred_check_branch
          %323 = sbr.rel (%p321) target = $region48
        $region47: #{tpu_custom_call.1} parent=11 // pred_region
          _
        $region48: #{tpu_custom_call.1} parent=11 // pred_fallthru
          _
        // Predicated region
        $region49: #{tpu_custom_call.1} parent=11 // pred_check
          %p324 = pneg %p256
        $region50: #{tpu_custom_call.1} parent=11 // pred_check_branch
          %326 = sbr.rel (%p324) target = $region52
        $region51: #{tpu_custom_call.1} parent=11 // pred_region
          _
        $region52: #{tpu_custom_call.1} parent=11 // pred_fallthru
          _
      $region12: #{tpu_custom_call.1} parent=5 // pred_fallthru
        _
      %p327 = scmp.lt.s32.totalorder %s20, 2
      // Predicated region
      $region53: #{tpu_custom_call.1} parent=5 // pred_check
        %p328 = pneg %p327
      $region54: #{tpu_custom_call.1} parent=5 // pred_check_branch
        %330 = sbr.rel (%p328) target = $region56
      $region55: #{tpu_custom_call.1} parent=5 // pred_region
        // Predicated region
        $region57: #{tpu_custom_call.1} parent=55 // pred_check
          %p331 = pneg %p40
        $region58: #{tpu_custom_call.1} parent=55 // pred_check_branch
          %333 = sbr.rel (%p331) target = $region60
        $region59: #{tpu_custom_call.1} parent=55 // pred_region
          %p334 = scmp.lt.s32.totalorder %s20, 1
          %s335 = scalar_select %p334, %s20, 1
          %s336 = smul.addr %s335, 8
          %s337 = smul.addr %s336, 8
          %s338 = scalar_lea.vmem %s0, %s337
        $region60: #{tpu_custom_call.1} parent=55 // pred_fallthru
          _
      $region56: #{tpu_custom_call.1} parent=5 // pred_fallthru
        _
      %p339 = scmp.le.s32.totalorder 1, %s20
      %p340 = scmp.lt.s32.totalorder %s20, 3
      %p341 = pnand %p339, %p340
      %p342 = pneg %p341
      // Predicated region
      $region61: #{tpu_custom_call.1} parent=5 // pred_check
        _
      $region62: #{tpu_custom_call.1} parent=5 // pred_check_branch
        %344 = sbr.rel (%p341) target = $region64
      $region63: #{tpu_custom_call.1} parent=5 // pred_region
        %s345 = ssub.s32 %s20, 1
        %p346 = scmp.lt.s32.totalorder %s25, 1
        %s347 = scalar_select %p346, %s25, 1
        %s348 = smul.addr %s347, 8
        %s349 = smul.addr %s348, 8
        %s350 = scalar_lea.vmem %s0, %s349
        %p351 = pneg %p46
        %p352 = pneg %p43
        %p353 = pneg %p67
        %p354 = pneg %p64
        %p355 = pneg %p88
        %p356 = pneg %p85
        %p357 = pneg %p109
        %p358 = pneg %p106
        %p359 = pneg %p130
        %p360 = pneg %p127
        %p361 = pneg %p151
        %p362 = pneg %p148
        %p363 = pneg %p172
        %p364 = pneg %p169
        %p365 = pneg %p193
        %p366 = pneg %p190
        %p367 = pneg %p214
        %p368 = pneg %p211
        %p369 = pneg %p235
        %p370 = pneg %p232
        %p371 = pneg %p256
        %p372 = pneg %p253
        %p373 = pneg %p282
        %p374 = pneg %p279
        %s375 = sand.u32 %s269, 1
        %s376 = scalar_lea.sflag [#allocation3], %s375
        %s377 = sand.u32 %s269, 1
        %s378 = smul.addr %s377, 64
        %s379 = scalar_lea.vmem [#allocation2], %s378
        %p380 = scmp.lt.s32.totalorder %s25, 1
        %s381 = scalar_select %p380, %s25, 1
        %s382 = smul.addr %s381, 8
        %s383 = smul.addr %s382, 8
        %s384 = scalar_lea.vmem %s0, %s383
        %v385 = vld [vmem:[%s1] sm:$0xff]
        %v386 = vld [vmem:[%s1 + $0x8] sm:$0xff]
        %v387 = vld [vmem:[%s1 + $0x10] sm:$0xff]
        %v388 = vld [vmem:[%s1 + $0x18] sm:$0xff]
        %v389 = vld [vmem:[%s1 + $0x20] sm:$0xff]
        %v390 = vld [vmem:[%s1 + $0x28] sm:$0xff]
        %v391 = vld [vmem:[%s1 + $0x30] sm:$0xff]
        %v392 = vld [vmem:[%s1 + $0x38] sm:$0xff]
        %v393 = vld [vmem:[%s1 + $0x40] sm:$0xff]
        %v394 = vld [vmem:[%s1 + $0x48] sm:$0xff]
        %v395 = vld [vmem:[%s1 + $0x50] sm:$0xff]
        %v396 = vld [vmem:[%s1 + $0x58] sm:$0xff]
        %v397 = vld [vmem:[%s1 + $0x60] sm:$0xff]
        %v398 = vld [vmem:[%s1 + $0x68] sm:$0xff]
        %v399 = vld [vmem:[%s1 + $0x70] sm:$0xff]
        %v400 = vld [vmem:[%s1 + $0x78] sm:$0xff]
        %v401 = vld [vmem:[%s1 + $0x80] sm:$0xff]
        %v402 = vld [vmem:[%s1 + $0x88] sm:$0xff]
        %v403 = vld [vmem:[%s1 + $0x90] sm:$0xff]
        %v404 = vld [vmem:[%s1 + $0x98] sm:$0xff]
        %v405 = vld [vmem:[%s1 + $0xa0] sm:$0xff]
        %v406 = vld [vmem:[%s1 + $0xa8] sm:$0xff]
        %v407 = vld [vmem:[%s1 + $0xb0] sm:$0xff]
        %v408 = vld [vmem:[%s1 + $0xb8] sm:$0xff]
        %v409 = vld [vmem:[%s1 + $0xc0] sm:$0xff]
        %v410 = vld [vmem:[%s1 + $0xc8] sm:$0xff]
        %v411 = vld [vmem:[%s1 + $0xd0] sm:$0xff]
        %v412 = vld [vmem:[%s1 + $0xd8] sm:$0xff]
        %v413 = vld [vmem:[%s1 + $0xe0] sm:$0xff]
        %v414 = vld [vmem:[%s1 + $0xe8] sm:$0xff]
        %v415 = vld [vmem:[%s1 + $0xf0] sm:$0xff]
        %v416 = vld [vmem:[%s1 + $0xf8] sm:$0xff]
        %v417 = vld [vmem:[%s2] sm:$0xff]
        %v418 = vld [vmem:[%s2 + $0x8] sm:$0xff]
        %v419 = vld [vmem:[%s2 + $0x10] sm:$0xff]
        %v420 = vld [vmem:[%s2 + $0x18] sm:$0xff]
        %v421 = vld [vmem:[%s3] sm:$0xff]
        %v422 = vld [vmem:[%s3 + $0x8] sm:$0xff]
        %v423 = vld [vmem:[%s3 + $0x10] sm:$0xff]
        %v424 = vld [vmem:[%s3 + $0x18] sm:$0xff]
        %v425 = vld [vmem:[%s4] sm:$0xff]
        %v426 = vld [vmem:[%s5] sm:$0xff]
        %v427 = vld [vmem:[%s6] sm:$0xff]
        %v428 = vld [vmem:[%s7] sm:$0xff]
        %v429 = vld [vmem:[%s7 + $0x8] sm:$0xff]
        %v430 = vld [vmem:[%s7 + $0x10] sm:$0xff]
        %v431 = vld [vmem:[%s7 + $0x18] sm:$0xff]
        %v432 = vld [vmem:[%s8] sm:$0xff]
        %v433 = vld [vmem:[%s8 + $0x8] sm:$0xff]
        %v434 = vld [vmem:[%s8 + $0x10] sm:$0xff]
        %v435 = vld [vmem:[%s8 + $0x18] sm:$0xff]
        %v436 = vld [vmem:[%s9] sm:$0xff]
        %v437 = vld [vmem:[%s9 + $0x8] sm:$0xff]
        %v438 = vld [vmem:[%s9 + $0x10] sm:$0xff]
        %v439 = vld [vmem:[%s9 + $0x18] sm:$0xff]
        %v440 = vld [vmem:[%s10] sm:$0xff]
        %v441 = vld [vmem:[%s10 + $0x8] sm:$0xff]
        %v442 = vld [vmem:[%s10 + $0x10] sm:$0xff]
        %v443 = vld [vmem:[%s10 + $0x18] sm:$0xff]
        %v444 = vld [vmem:[%s384] sm:$0xff]
        %v445 = vld [vmem:[%s384 + $0x8] sm:$0xff]
        %v446 = vld [vmem:[%s384 + $0x10] sm:$0xff]
        %v447 = vld [vmem:[%s384 + $0x18] sm:$0xff]
        %v448 = vld [vmem:[%s384 + $0x20] sm:$0xff]
        %v449 = vld [vmem:[%s384 + $0x28] sm:$0xff]
        %v450 = vld [vmem:[%s384 + $0x30] sm:$0xff]
        %v451 = vld [vmem:[%s384 + $0x38] sm:$0xff]
        %452 = vmatprep.subr.mxu0 0.0
        %453 = vmatpush1.msra.mxu0 %v385
        %454 = vmatprep.subr.mxu0 0.0
        %455 = vmatpush1.msra.mxu0 %v386
        %456 = vmatprep.subr.mxu0 0.0
        %457 = vmatpush1.msra.mxu0 %v387
        %458 = vmatprep.subr.mxu0 0.0
        %459 = vmatpush1.msra.mxu0 %v388
        %460 = vmatprep.subr.mxu0 0.0
        %461 = vmatpush1.msra.mxu0 %v389
        %462 = vmatprep.subr.mxu0 0.0
        %463 = vmatpush1.msra.mxu0 %v390
        %464 = vmatprep.subr.mxu0 0.0
        %465 = vmatpush1.msra.mxu0 %v391
        %466 = vmatprep.subr.mxu0 0.0
        %467 = vmatpush1.msra.mxu0 %v392
        %468 = vmatprep.subr.mxu0 0.0
        %469 = vmatpush1.msra.mxu0 %v393
        %470 = vmatprep.subr.mxu0 0.0
        %471 = vmatpush1.msra.mxu0 %v394
        %472 = vmatprep.subr.mxu0 0.0
        %473 = vmatpush1.msra.mxu0 %v395
        %474 = vmatprep.subr.mxu0 0.0
        %475 = vmatpush1.msra.mxu0 %v396
        %476 = vmatprep.subr.mxu0 0.0
        %477 = vmatpush1.msra.mxu0 %v397
        %478 = vmatprep.subr.mxu0 0.0
        %479 = vmatpush1.msra.mxu0 %v398
        %480 = vmatprep.subr.mxu0 0.0
        %481 = vmatpush1.msra.mxu0 %v399
        %482 = vmatprep.subr.mxu0 0.0
        %483 = vmatpush1.msra.mxu0 %v400
        %484 = vmatprep.subr.mxu0 0.0
        %485 = vmatpush1.msra.mxu0 %v401
        %486 = vmatprep.subr.mxu0 0.0
        %487 = vmatpush1.msra.mxu0 %v402
        %488 = vmatprep.subr.mxu0 0.0
        %489 = vmatpush1.msra.mxu0 %v403
        %490 = vmatprep.subr.mxu0 0.0
        %491 = vmatpush1.msra.mxu0 %v404
        %492 = vmatprep.subr.mxu0 0.0
        %493 = vmatpush1.msra.mxu0 %v405
        %494 = vmatprep.subr.mxu0 0.0
        %495 = vmatpush1.msra.mxu0 %v406
        %496 = vmatprep.subr.mxu0 0.0
        %497 = vmatpush1.msra.mxu0 %v407
        %498 = vmatprep.subr.mxu0 0.0
        %499 = vmatpush1.msra.mxu0 %v408
        %500 = vmatprep.subr.mxu0 0.0
        %501 = vmatpush1.msra.mxu0 %v409
        %502 = vmatprep.subr.mxu0 0.0
        %503 = vmatpush1.msra.mxu0 %v410
        %504 = vmatprep.subr.mxu0 0.0
        %505 = vmatpush1.msra.mxu0 %v411
        %506 = vmatprep.subr.mxu0 0.0
        %507 = vmatpush1.msra.mxu0 %v412
        %508 = vmatprep.subr.mxu0 0.0
        %509 = vmatpush1.msra.mxu0 %v413
        %510 = vmatprep.subr.mxu0 0.0
        %511 = vmatpush1.msra.mxu0 %v414
        %512 = vmatprep.subr.mxu0 0.0
        %513 = vmatpush1.msra.mxu0 %v415
        %514 = vmatprep.subr.mxu0 0.0
        %515 = vmatpush1.msra.mxu0 %v416
        %516 = vmatprep.mubr.f32.mxu0 %v445
        %517 = vmatmul.mubr.f32.gmra.mrb[0].mxu0 %v444
        %v518 = vpop.f32.mrb[0].mxu0
        %v519 = vadd.f32 0.0, %v518
        %v520 = vpop.f32.mrb[0].mxu0
        %521 = vmatprep.mubr.f32.mxu0 %v447
        %522 = vmatmul.mubr.f32.gmra.mrb[0].mxu0 %v446
        %v523 = vpop.f32.mrb[0].mxu0
        %v524 = vadd.f32 0.0, %v523
        %v525 = vpop.f32.mrb[0].mxu0
        %526 = vmatprep.mubr.f32.mxu0 %v449
        %527 = vmatmul.mubr.f32.gmra.mrb[0].mxu0 %v448
        %v528 = vpop.f32.mrb[0].mxu0
        %v529 = vadd.f32 0.0, %v528
        %v530 = vpop.f32.mrb[0].mxu0
        %531 = vmatprep.mubr.f32.mxu0 %v451
        %532 = vmatmul.mubr.f32.gmra.mrb[0].mxu0 %v450
        %v533 = vpop.f32.mrb[0].mxu0
        %v534 = vadd.f32 0.0, %v533
        %v535 = vpop.f32.mrb[0].mxu0
        %536 = vdwg.mxu0
        %vm537 = vcmask 261120
        %v539 = vsel %vm537, %v425, 0
        %541 = vmatprep.subr.mxu0 0.0
        %542 = vmatpush1.msra.mxu0 %v519
        %543 = vmatprep.subr.mxu0 0.0
        %544 = vmatpush1.msra.mxu0 %v524
        %545 = vmatprep.subr.mxu0 0.0
        %546 = vmatpush1.msra.mxu0 %v529
        %547 = vmatprep.subr.mxu0 0.0
        %548 = vmatpush1.msra.mxu0 %v534
        %549 = vmatprep.subr.mxu0 0.0
        %550 = vmatpush1.msra.mxu0 0.0
        %551 = vmatprep.subr.mxu0 0.0
        %552 = vmatpush1.msra.mxu0 0.0
        %553 = vmatprep.subr.mxu0 0.0
        %554 = vmatpush1.msra.mxu0 0.0
        %555 = vmatprep.subr.mxu0 0.0
        %556 = vmatpush1.msra.mxu0 0.0
        %557 = vmatprep.subr.mxu0 0.0
        %558 = vmatpush1.msra.mxu0 0.0
        %559 = vmatprep.subr.mxu0 0.0
        %560 = vmatpush1.msra.mxu0 0.0
        %561 = vmatprep.subr.mxu0 0.0
        %562 = vmatpush1.msra.mxu0 0.0
        %563 = vmatprep.subr.mxu0 0.0
        %564 = vmatpush1.msra.mxu0 0.0
        %565 = vmatprep.subr.mxu0 0.0
        %566 = vmatpush1.msra.mxu0 0.0
        %567 = vmatprep.subr.mxu0 0.0
        %568 = vmatpush1.msra.mxu0 0.0
        %569 = vmatprep.subr.mxu0 0.0
        %570 = vmatpush1.msra.mxu0 0.0
        %571 = vmatprep.subr.mxu0 0.0
        %572 = vmatpush1.msra.mxu0 0.0
        %573 = vmatprep.subr.mxu0 0.0
        %574 = vmatpush1.msra.mxu0 0.0
        %575 = vmatprep.subr.mxu0 0.0
        %576 = vmatpush1.msra.mxu0 0.0
        %577 = vmatprep.subr.mxu0 0.0
        %578 = vmatpush1.msra.mxu0 0.0
        %579 = vmatprep.subr.mxu0 0.0
        %580 = vmatpush1.msra.mxu0 0.0
        %581 = vmatprep.subr.mxu0 0.0
        %582 = vmatpush1.msra.mxu0 0.0
        %583 = vmatprep.subr.mxu0 0.0
        %584 = vmatpush1.msra.mxu0 0.0
        %585 = vmatprep.subr.mxu0 0.0
        %586 = vmatpush1.msra.mxu0 0.0
        %587 = vmatprep.subr.mxu0 0.0
        %588 = vmatpush1.msra.mxu0 0.0
        %589 = vmatprep.subr.mxu0 0.0
        %590 = vmatpush1.msra.mxu0 0.0
        %591 = vmatprep.subr.mxu0 0.0
        %592 = vmatpush1.msra.mxu0 0.0
        %593 = vmatprep.subr.mxu0 0.0
        %594 = vmatpush1.msra.mxu0 0.0
        %595 = vmatprep.subr.mxu0 0.0
        %596 = vmatpush1.msra.mxu0 0.0
        %597 = vmatprep.subr.mxu0 0.0
        %598 = vmatpush1.msra.mxu0 0.0
        %599 = vmatprep.subr.mxu0 0.0
        %600 = vmatpush1.msra.mxu0 0.0
        %601 = vmatprep.subr.mxu0 0.0
        %602 = vmatpush1.msra.mxu0 0.0
        %603 = vmatprep.subr.mxu0 0.0
        %604 = vmatpush1.msra.mxu0 0.0
        %605 = vmatprep.mubr.f32.mxu0 0.0
        %606 = vmatmul.mubr.f32.gmra.mrb[0].mxu0 %v539
        %v607 = vpop.f32.mrb[0].mxu0
        %v608 = vadd.f32 0.0, %v607
        %v609 = vpop.f32.mrb[0].mxu0
        %610 = vdwg.mxu0
        %612 = vset.pattern.permute.xlu0 0
        %613 = vperm.xlu0 %612, %v426
        %v614 = vpop.permute.xlu0 %613
        %v616 = vmul.f32 %v608, %v614
        %618 = vset.pattern.permute.xlu0 0
        %619 = vperm.xlu0 %618, %v427
        %v620 = vpop.permute.xlu0 %619
        %v622 = vadd.f32 %v616, %v620
        %v623 = vadd.f32 %v622, 3.0
        %v624 = vmax.f32 %v623, 0.0
        %v625 = vmin.f32 %v624, 6.0
        %v626 = vmul.f32 %v625, 0.16666667
        %v627 = vmul.f32 %v622, %v626
        %629 = vset.pattern.permute.xlu0 0
        %630 = vperm.xlu0 %629, %v432
        %v631 = vpop.permute.xlu0 %630
        %634 = vset.pattern.permute.xlu0 0
        %635 = vperm.xlu0 %634, %v433
        %v636 = vpop.permute.xlu0 %635
        %639 = vset.pattern.permute.xlu0 0
        %640 = vperm.xlu0 %639, %v434
        %v641 = vpop.permute.xlu0 %640
        %644 = vset.pattern.permute.xlu0 0
        %645 = vperm.xlu0 %644, %v435
        %v646 = vpop.permute.xlu0 %645
        %vm648 = vcmask 64512
        %v650 = vsel %vm648, %v428, 0
        %v653 = vsel %vm648, %v429, 0
        %v656 = vsel %vm648, %v430, 0
        %v659 = vsel %vm648, %v431, 0
        %661 = vmatprep.subr.mxu0 0.0
        %662 = vmatpush1.msra.mxu0 %v627
        %663 = vmatprep.subr.mxu0 0.0
        %664 = vmatpush1.msra.mxu0 0.0
        %665 = vmatprep.subr.mxu0 0.0
        %666 = vmatpush1.msra.mxu0 0.0
        %667 = vmatprep.subr.mxu0 0.0
        %668 = vmatpush1.msra.mxu0 0.0
        %669 = vmatprep.subr.mxu0 0.0
        %670 = vmatpush1.msra.mxu0 0.0
        %671 = vmatprep.subr.mxu0 0.0
        %672 = vmatpush1.msra.mxu0 0.0
        %673 = vmatprep.subr.mxu0 0.0
        %674 = vmatpush1.msra.mxu0 0.0
        %675 = vmatprep.subr.mxu0 0.0
        %676 = vmatpush1.msra.mxu0 0.0
        %677 = vmatprep.subr.mxu0 0.0
        %678 = vmatpush1.msra.mxu0 0.0
        %679 = vmatprep.subr.mxu0 0.0
        %680 = vmatpush1.msra.mxu0 0.0
        %681 = vmatprep.subr.mxu0 0.0
        %682 = vmatpush1.msra.mxu0 0.0
        %683 = vmatprep.subr.mxu0 0.0
        %684 = vmatpush1.msra.mxu0 0.0
        %685 = vmatprep.subr.mxu0 0.0
        %686 = vmatpush1.msra.mxu0 0.0
        %687 = vmatprep.subr.mxu0 0.0
        %688 = vmatpush1.msra.mxu0 0.0
        %689 = vmatprep.subr.mxu0 0.0
        %690 = vmatpush1.msra.mxu0 0.0
        %691 = vmatprep.subr.mxu0 0.0
        %692 = vmatpush1.msra.mxu0 0.0
        %693 = vmatprep.subr.mxu0 0.0
        %694 = vmatpush1.msra.mxu0 0.0
        %695 = vmatprep.subr.mxu0 0.0
        %696 = vmatpush1.msra.mxu0 0.0
        %697 = vmatprep.subr.mxu0 0.0
        %698 = vmatpush1.msra.mxu0 0.0
        %699 = vmatprep.subr.mxu0 0.0
        %700 = vmatpush1.msra.mxu0 0.0
        %701 = vmatprep.subr.mxu0 0.0
        %702 = vmatpush1.msra.mxu0 0.0
        %703 = vmatprep.subr.mxu0 0.0
        %704 = vmatpush1.msra.mxu0 0.0
        %705 = vmatprep.subr.mxu0 0.0
        %706 = vmatpush1.msra.mxu0 0.0
        %707 = vmatprep.subr.mxu0 0.0
        %708 = vmatpush1.msra.mxu0 0.0
        %709 = vmatprep.subr.mxu0 0.0
        %710 = vmatpush1.msra.mxu0 0.0
        %711 = vmatprep.subr.mxu0 0.0
        %712 = vmatpush1.msra.mxu0 0.0
        %713 = vmatprep.subr.mxu0 0.0
        %714 = vmatpush1.msra.mxu0 0.0
        %715 = vmatprep.subr.mxu0 0.0
        %716 = vmatpush1.msra.mxu0 0.0
        %717 = vmatprep.subr.mxu0 0.0
        %718 = vmatpush1.msra.mxu0 0.0
        %719 = vmatprep.subr.mxu0 0.0
        %720 = vmatpush1.msra.mxu0 0.0
        %721 = vmatprep.subr.mxu0 0.0
        %722 = vmatpush1.msra.mxu0 0.0
        %723 = vmatprep.subr.mxu0 0.0
        %724 = vmatpush1.msra.mxu0 0.0
        %725 = vmatprep.mubr.f32.mxu0 0.0
        %726 = vmatmul.mubr.f32.gmra.mrb[0].mxu0 %v650
        %v727 = vpop.f32.mrb[0].mxu0
        %v728 = vadd.f32 %v631, %v727
        %v729 = vpop.f32.mrb[0].mxu0
        %730 = vmatprep.mubr.f32.mxu0 0.0
        %731 = vmatmul.mubr.f32.gmra.mrb[0].mxu0 %v653
        %v732 = vpop.f32.mrb[0].mxu0
        %v733 = vadd.f32 %v636, %v732
        %v734 = vpop.f32.mrb[0].mxu0
        %735 = vmatprep.mubr.f32.mxu0 0.0
        %736 = vmatmul.mubr.f32.gmra.mrb[0].mxu0 %v656
        %v737 = vpop.f32.mrb[0].mxu0
        %v738 = vadd.f32 %v641, %v737
        %v739 = vpop.f32.mrb[0].mxu0
        %740 = vmatprep.mubr.f32.mxu0 0.0
        %741 = vmatmul.mubr.f32.gmra.mrb[0].mxu0 %v659
        %v742 = vpop.f32.mrb[0].mxu0
        %v743 = vadd.f32 %v646, %v742
        %v744 = vpop.f32.mrb[0].mxu0
        %745 = vdwg.mxu0
        %747 = vset.pattern.permute.xlu0 0
        %748 = vperm.xlu0 %747, %v440
        %v749 = vpop.permute.xlu0 %748
        %752 = vset.pattern.permute.xlu0 0
        %753 = vperm.xlu0 %752, %v441
        %v754 = vpop.permute.xlu0 %753
        %757 = vset.pattern.permute.xlu0 0
        %758 = vperm.xlu0 %757, %v442
        %v759 = vpop.permute.xlu0 %758
        %762 = vset.pattern.permute.xlu0 0
        %763 = vperm.xlu0 %762, %v443
        %v764 = vpop.permute.xlu0 %763
        %767 = vrot.lane.b32.xlu0 %v627, 112
        %v768 = vpop.permute.xlu0 %767
        %v771 = vsel %vm648, %v436, 0
        %v774 = vsel %vm648, %v437, 0
        %v777 = vsel %vm648, %v438, 0
        %v780 = vsel %vm648, %v439, 0
        %782 = vmatprep.subr.mxu0 0.0
        %783 = vmatpush1.msra.mxu0 %v768
        %784 = vmatprep.subr.mxu0 0.0
        %785 = vmatpush1.msra.mxu0 0.0
        %786 = vmatprep.subr.mxu0 0.0
        %787 = vmatpush1.msra.mxu0 0.0
        %788 = vmatprep.subr.mxu0 0.0
        %789 = vmatpush1.msra.mxu0 0.0
        %790 = vmatprep.subr.mxu0 0.0
        %791 = vmatpush1.msra.mxu0 0.0
        %792 = vmatprep.subr.mxu0 0.0
        %793 = vmatpush1.msra.mxu0 0.0
        %794 = vmatprep.subr.mxu0 0.0
        %795 = vmatpush1.msra.mxu0 0.0
        %796 = vmatprep.subr.mxu0 0.0
        %797 = vmatpush1.msra.mxu0 0.0
        %798 = vmatprep.subr.mxu0 0.0
        %799 = vmatpush1.msra.mxu0 0.0
        %800 = vmatprep.subr.mxu0 0.0
        %801 = vmatpush1.msra.mxu0 0.0
        %802 = vmatprep.subr.mxu0 0.0
        %803 = vmatpush1.msra.mxu0 0.0
        %804 = vmatprep.subr.mxu0 0.0
        %805 = vmatpush1.msra.mxu0 0.0
        %806 = vmatprep.subr.mxu0 0.0
        %807 = vmatpush1.msra.mxu0 0.0
        %808 = vmatprep.subr.mxu0 0.0
        %809 = vmatpush1.msra.mxu0 0.0
        %810 = vmatprep.subr.mxu0 0.0
        %811 = vmatpush1.msra.mxu0 0.0
        %812 = vmatprep.subr.mxu0 0.0
        %813 = vmatpush1.msra.mxu0 0.0
        %814 = vmatprep.subr.mxu0 0.0
        %815 = vmatpush1.msra.mxu0 0.0
        %816 = vmatprep.subr.mxu0 0.0
        %817 = vmatpush1.msra.mxu0 0.0
        %818 = vmatprep.subr.mxu0 0.0
        %819 = vmatpush1.msra.mxu0 0.0
        %820 = vmatprep.subr.mxu0 0.0
        %821 = vmatpush1.msra.mxu0 0.0
        %822 = vmatprep.subr.mxu0 0.0
        %823 = vmatpush1.msra.mxu0 0.0
        %824 = vmatprep.subr.mxu0 0.0
        %825 = vmatpush1.msra.mxu0 0.0
        %826 = vmatprep.subr.mxu0 0.0
        %827 = vmatpush1.msra.mxu0 0.0
        %828 = vmatprep.subr.mxu0 0.0
        %829 = vmatpush1.msra.mxu0 0.0
        %830 = vmatprep.subr.mxu0 0.0
        %831 = vmatpush1.msra.mxu0 0.0
        %832 = vmatprep.subr.mxu0 0.0
        %833 = vmatpush1.msra.mxu0 0.0
        %834 = vmatprep.subr.mxu0 0.0
        %835 = vmatpush1.msra.mxu0 0.0
        %836 = vmatprep.subr.mxu0 0.0
        %837 = vmatpush1.msra.mxu0 0.0
        %838 = vmatprep.subr.mxu0 0.0
        %839 = vmatpush1.msra.mxu0 0.0
        %840 = vmatprep.subr.mxu0 0.0
        %841 = vmatpush1.msra.mxu0 0.0
        %842 = vmatprep.subr.mxu0 0.0
        %843 = vmatpush1.msra.mxu0 0.0
        %844 = vmatprep.subr.mxu0 0.0
        %845 = vmatpush1.msra.mxu0 0.0
        %846 = vmatprep.mubr.f32.mxu0 0.0
        %847 = vmatmul.mubr.f32.gmra.mrb[0].mxu0 %v771
        %v848 = vpop.f32.mrb[0].mxu0
        %v849 = vadd.f32 %v749, %v848
        %v850 = vpop.f32.mrb[0].mxu0
        %851 = vmatprep.mubr.f32.mxu0 0.0
        %852 = vmatmul.mubr.f32.gmra.mrb[0].mxu0 %v774
        %v853 = vpop.f32.mrb[0].mxu0
        %v854 = vadd.f32 %v754, %v853
        %v855 = vpop.f32.mrb[0].mxu0
        %856 = vmatprep.mubr.f32.mxu0 0.0
        %857 = vmatmul.mubr.f32.gmra.mrb[0].mxu0 %v777
        %v858 = vpop.f32.mrb[0].mxu0
        %v859 = vadd.f32 %v759, %v858
        %v860 = vpop.f32.mrb[0].mxu0
        %861 = vmatprep.mubr.f32.mxu0 0.0
        %862 = vmatmul.mubr.f32.gmra.mrb[0].mxu0 %v780
        %v863 = vpop.f32.mrb[0].mxu0
        %v864 = vadd.f32 %v764, %v863
        %v865 = vpop.f32.mrb[0].mxu0
        %866 = vdwg.mxu0
        %v867 = vsub.f32 0.0, %v728
        %v868 = vsub.f32 0.0, %v733
        %v869 = vsub.f32 0.0, %v738
        %v870 = vsub.f32 0.0, %v743
        %v871 = vmul.f32 %v867, 1.442695
        %v872 = vpow.pop %v871
        %v873 = vmul.f32 %v868, 1.442695
        %v874 = vpow.pop %v873
        %v875 = vmul.f32 %v869, 1.442695
        %v876 = vpow.pop %v875
        %v877 = vmul.f32 %v870, 1.442695
        %v878 = vpow.pop %v877
        %v879 = vadd.f32 %v872, 1.0
        %v880 = vadd.f32 %v874, 1.0
        %v881 = vadd.f32 %v876, 1.0
        %v882 = vadd.f32 %v878, 1.0
        %v883 = vrcp.pop %v879
        %v884 = vrcp.pop %v880
        %v885 = vrcp.pop %v881
        %v886 = vrcp.pop %v882
        %v887 = vsub.f32 0.0, %v849
        %v888 = vsub.f32 0.0, %v854
        %v889 = vsub.f32 0.0, %v859
        %v890 = vsub.f32 0.0, %v864
        %v891 = vmul.f32 %v887, 1.442695
        %v892 = vpow.pop %v891
        %v893 = vmul.f32 %v888, 1.442695
        %v894 = vpow.pop %v893
        %v895 = vmul.f32 %v889, 1.442695
        %v896 = vpow.pop %v895
        %v897 = vmul.f32 %v890, 1.442695
        %v898 = vpow.pop %v897
        %v899 = vadd.f32 %v892, 1.0
        %v900 = vadd.f32 %v894, 1.0
        %v901 = vadd.f32 %v896, 1.0
        %v902 = vadd.f32 %v898, 1.0
        %v903 = vrcp.pop %v899
        %v904 = vrcp.pop %v900
        %v905 = vrcp.pop %v901
        %v906 = vrcp.pop %v902
        %vm907 = vcmask 130048
        %v909 = vsel %vm907, %v883, 0
        %v912 = vsel %vm907, %v884, 0
        %v915 = vsel %vm907, %v885, 0
        %v918 = vsel %vm907, %v886, 0
        %920 = vmatprep.subr.mxu0 %v418
        %921 = vmatpush1.msra.mxu0 %v417
        %922 = vmatprep.subr.mxu0 %v420
        %923 = vmatpush1.msra.mxu0 %v419
        %924 = vmatprep.subr.mxu0 0.0
        %925 = vmatpush1.msra.mxu0 0.0
        %926 = vmatprep.subr.mxu0 0.0
        %927 = vmatpush1.msra.mxu0 0.0
        %928 = vmatprep.subr.mxu0 0.0
        %929 = vmatpush1.msra.mxu0 0.0
        %930 = vmatprep.subr.mxu0 0.0
        %931 = vmatpush1.msra.mxu0 0.0
        %932 = vmatprep.subr.mxu0 0.0
        %933 = vmatpush1.msra.mxu0 0.0
        %934 = vmatprep.subr.mxu0 0.0
        %935 = vmatpush1.msra.mxu0 0.0
        %936 = vmatprep.subr.mxu0 0.0
        %937 = vmatpush1.msra.mxu0 0.0
        %938 = vmatprep.subr.mxu0 0.0
        %939 = vmatpush1.msra.mxu0 0.0
        %940 = vmatprep.subr.mxu0 0.0
        %941 = vmatpush1.msra.mxu0 0.0
        %942 = vmatprep.subr.mxu0 0.0
        %943 = vmatpush1.msra.mxu0 0.0
        %944 = vmatprep.subr.mxu0 0.0
        %945 = vmatpush1.msra.mxu0 0.0
        %946 = vmatprep.subr.mxu0 0.0
        %947 = vmatpush1.msra.mxu0 0.0
        %948 = vmatprep.subr.mxu0 0.0
        %949 = vmatpush1.msra.mxu0 0.0
        %950 = vmatprep.subr.mxu0 0.0
        %951 = vmatpush1.msra.mxu0 0.0
        %952 = vmatprep.subr.mxu0 0.0
        %953 = vmatpush1.msra.mxu0 0.0
        %954 = vmatprep.subr.mxu0 0.0
        %955 = vmatpush1.msra.mxu0 0.0
        %956 = vmatprep.subr.mxu0 0.0
        %957 = vmatpush1.msra.mxu0 0.0
        %958 = vmatprep.subr.mxu0 0.0
        %959 = vmatpush1.msra.mxu0 0.0
        %960 = vmatprep.subr.mxu0 0.0
        %961 = vmatpush1.msra.mxu0 0.0
        %962 = vmatprep.subr.mxu0 0.0
        %963 = vmatpush1.msra.mxu0 0.0
        %964 = vmatprep.subr.mxu0 0.0
        %965 = vmatpush1.msra.mxu0 0.0
        %966 = vmatprep.subr.mxu0 0.0
        %967 = vmatpush1.msra.mxu0 0.0
        %968 = vmatprep.subr.mxu0 0.0
        %969 = vmatpush1.msra.mxu0 0.0
        %970 = vmatprep.subr.mxu0 0.0
        %971 = vmatpush1.msra.mxu0 0.0
        %972 = vmatprep.subr.mxu0 0.0
        %973 = vmatpush1.msra.mxu0 0.0
        %974 = vmatprep.subr.mxu0 0.0
        %975 = vmatpush1.msra.mxu0 0.0
        %976 = vmatprep.subr.mxu0 0.0
        %977 = vmatpush1.msra.mxu0 0.0
        %978 = vmatprep.subr.mxu0 0.0
        %979 = vmatpush1.msra.mxu0 0.0
        %980 = vmatprep.subr.mxu0 0.0
        %981 = vmatpush1.msra.mxu0 0.0
        %982 = vmatprep.subr.mxu0 0.0
        %983 = vmatpush1.msra.mxu0 0.0
        %984 = vmatprep.mubr.f32.mxu0 0.0
        %985 = vmatmul.mubr.f32.gmra.mrb[0].mxu0 %v909
        %v986 = vpop.f32.mrb[0].mxu0
        %v987 = vadd.f32 0.0, %v986
        %v988 = vpop.f32.mrb[0].mxu0
        %v989 = vadd.f32 0.0, %v988
        %990 = vmatprep.mubr.f32.mxu0 0.0
        %991 = vmatmul.mubr.f32.gmra.mrb[0].mxu0 %v912
        %v992 = vpop.f32.mrb[0].mxu0
        %v993 = vadd.f32 0.0, %v992
        %v994 = vpop.f32.mrb[0].mxu0
        %v995 = vadd.f32 0.0, %v994
        %996 = vmatprep.mubr.f32.mxu0 0.0
        %997 = vmatmul.mubr.f32.gmra.mrb[0].mxu0 %v915
        %v998 = vpop.f32.mrb[0].mxu0
        %v999 = vadd.f32 0.0, %v998
        %v1000 = vpop.f32.mrb[0].mxu0
        %v1001 = vadd.f32 0.0, %v1000
        %1002 = vmatprep.mubr.f32.mxu0 0.0
        %1003 = vmatmul.mubr.f32.gmra.mrb[0].mxu0 %v918
        %v1004 = vpop.f32.mrb[0].mxu0
        %v1005 = vadd.f32 0.0, %v1004
        %v1006 = vpop.f32.mrb[0].mxu0
        %v1007 = vadd.f32 0.0, %v1006
        %1008 = vdwg.mxu0
        %v1010 = vsel %vm907, %v903, 0
        %v1013 = vsel %vm907, %v904, 0
        %v1016 = vsel %vm907, %v905, 0
        %v1019 = vsel %vm907, %v906, 0
        %1021 = vmatprep.subr.mxu0 %v422
        %1022 = vmatpush1.msra.mxu0 %v421
        %1023 = vmatprep.subr.mxu0 %v424
        %1024 = vmatpush1.msra.mxu0 %v423
        %1025 = vmatprep.subr.mxu0 0.0
        %1026 = vmatpush1.msra.mxu0 0.0
        %1027 = vmatprep.subr.mxu0 0.0
        %1028 = vmatpush1.msra.mxu0 0.0
        %1029 = vmatprep.subr.mxu0 0.0
        %1030 = vmatpush1.msra.mxu0 0.0
        %1031 = vmatprep.subr.mxu0 0.0
        %1032 = vmatpush1.msra.mxu0 0.0
        %1033 = vmatprep.subr.mxu0 0.0
        %1034 = vmatpush1.msra.mxu0 0.0
        %1035 = vmatprep.subr.mxu0 0.0
        %1036 = vmatpush1.msra.mxu0 0.0
        %1037 = vmatprep.subr.mxu0 0.0
        %1038 = vmatpush1.msra.mxu0 0.0
        %1039 = vmatprep.subr.mxu0 0.0
        %1040 = vmatpush1.msra.mxu0 0.0
        %1041 = vmatprep.subr.mxu0 0.0
        %1042 = vmatpush1.msra.mxu0 0.0
        %1043 = vmatprep.subr.mxu0 0.0
        %1044 = vmatpush1.msra.mxu0 0.0
        %1045 = vmatprep.subr.mxu0 0.0
        %1046 = vmatpush1.msra.mxu0 0.0
        %1047 = vmatprep.subr.mxu0 0.0
        %1048 = vmatpush1.msra.mxu0 0.0
        %1049 = vmatprep.subr.mxu0 0.0
        %1050 = vmatpush1.msra.mxu0 0.0
        %1051 = vmatprep.subr.mxu0 0.0
        %1052 = vmatpush1.msra.mxu0 0.0
        %1053 = vmatprep.subr.mxu0 0.0
        %1054 = vmatpush1.msra.mxu0 0.0
        %1055 = vmatprep.subr.mxu0 0.0
        %1056 = vmatpush1.msra.mxu0 0.0
        %1057 = vmatprep.subr.mxu0 0.0
        %1058 = vmatpush1.msra.mxu0 0.0
        %1059 = vmatprep.subr.mxu0 0.0
        %1060 = vmatpush1.msra.mxu0 0.0
        %1061 = vmatprep.subr.mxu0 0.0
        %1062 = vmatpush1.msra.mxu0 0.0
        %1063 = vmatprep.subr.mxu0 0.0
        %1064 = vmatpush1.msra.mxu0 0.0
        %1065 = vmatprep.subr.mxu0 0.0
        %1066 = vmatpush1.msra.mxu0 0.0
        %1067 = vmatprep.subr.mxu0 0.0
        %1068 = vmatpush1.msra.mxu0 0.0
        %1069 = vmatprep.subr.mxu0 0.0
        %1070 = vmatpush1.msra.mxu0 0.0
        %1071 = vmatprep.subr.mxu0 0.0
        %1072 = vmatpush1.msra.mxu0 0.0
        %1073 = vmatprep.subr.mxu0 0.0
        %1074 = vmatpush1.msra.mxu0 0.0
        %1075 = vmatprep.subr.mxu0 0.0
        %1076 = vmatpush1.msra.mxu0 0.0
        %1077 = vmatprep.subr.mxu0 0.0
        %1078 = vmatpush1.msra.mxu0 0.0
        %1079 = vmatprep.subr.mxu0 0.0
        %1080 = vmatpush1.msra.mxu0 0.0
        %1081 = vmatprep.subr.mxu0 0.0
        %1082 = vmatpush1.msra.mxu0 0.0
        %1083 = vmatprep.subr.mxu0 0.0
        %1084 = vmatpush1.msra.mxu0 0.0
        %1085 = vmatprep.mubr.f32.mxu0 0.0
        %1086 = vmatmul.mubr.f32.gmra.mrb[0].mxu0 %v1010
        %v1087 = vpop.f32.mrb[0].mxu0
        %v1088 = vadd.f32 0.0, %v1087
        %v1089 = vpop.f32.mrb[0].mxu0
        %v1090 = vadd.f32 0.0, %v1089
        %1091 = vmatprep.mubr.f32.mxu0 0.0
        %1092 = vmatmul.mubr.f32.gmra.mrb[0].mxu0 %v1013
        %v1093 = vpop.f32.mrb[0].mxu0
        %v1094 = vadd.f32 0.0, %v1093
        %v1095 = vpop.f32.mrb[0].mxu0
        %v1096 = vadd.f32 0.0, %v1095
        %1097 = vmatprep.mubr.f32.mxu0 0.0
        %1098 = vmatmul.mubr.f32.gmra.mrb[0].mxu0 %v1016
        %v1099 = vpop.f32.mrb[0].mxu0
        %v1100 = vadd.f32 0.0, %v1099
        %v1101 = vpop.f32.mrb[0].mxu0
        %v1102 = vadd.f32 0.0, %v1101
        %1103 = vmatprep.mubr.f32.mxu0 0.0
        %1104 = vmatmul.mubr.f32.gmra.mrb[0].mxu0 %v1019
        %v1105 = vpop.f32.mrb[0].mxu0
        %v1106 = vadd.f32 0.0, %v1105
        %v1107 = vpop.f32.mrb[0].mxu0
        %v1108 = vadd.f32 0.0, %v1107
        %1109 = vdwg.mxu0
        %v1110 = vmul.f32 %v444, %v987
        %v1111 = vmul.f32 %v445, %v989
        %v1112 = vmul.f32 %v446, %v993
        %v1113 = vmul.f32 %v447, %v995
        %v1114 = vmul.f32 %v448, %v999
        %v1115 = vmul.f32 %v449, %v1001
        %v1116 = vmul.f32 %v450, %v1005
        %v1117 = vmul.f32 %v451, %v1007
        %v1118 = vmul.f32 %v1110, %v1088
        %v1119 = vmul.f32 %v1111, %v1090
        %v1120 = vmul.f32 %v1112, %v1094
        %v1121 = vmul.f32 %v1113, %v1096
        %v1122 = vmul.f32 %v1114, %v1100
        %v1123 = vmul.f32 %v1115, %v1102
        %v1124 = vmul.f32 %v1116, %v1106
        %v1125 = vmul.f32 %v1117, %v1108
        %1126 = vst [vmem:[%s379] sm:$0xff] %v1118
        %1127 = vst [vmem:[%s379 + $0x8] sm:$0xff] %v1119
        %1128 = vst [vmem:[%s379 + $0x10] sm:$0xff] %v1120
        %1129 = vst [vmem:[%s379 + $0x18] sm:$0xff] %v1121
        %1130 = vst [vmem:[%s379 + $0x20] sm:$0xff] %v1122
        %1131 = vst [vmem:[%s379 + $0x28] sm:$0xff] %v1123
        %1132 = vst [vmem:[%s379 + $0x30] sm:$0xff] %v1124
        %1133 = vst [vmem:[%s379 + $0x38] sm:$0xff] %v1125
        %s1134 = sand.u32 %s269, 1
        %s1135 = scalar_lea.sflag [#allocation3], %s1134
        %s1136 = sand.u32 %s269, 1
        %s1137 = smul.addr %s1136, 64
        %s1138 = scalar_lea.vmem [#allocation2], %s1137
        // Predicated region
        $region65: #{tpu_custom_call.1} parent=63 // pred_check
          %p1139 = pneg %p279
        $region66: #{tpu_custom_call.1} parent=63 // pred_check_branch
          %1141 = sbr.rel (%p1139) target = $region68
        $region67: #{tpu_custom_call.1} parent=63 // pred_region
          %s1143 = ssub.s32 1024, 1024
          %1144 = vsyncadd %s1135, %s1143
          %s1145 = smul.addr %s25, 8
          %s1146 = smul.addr %s1145, 128
          %s1147 = scalar_lea.hbm %s11, %s1146
          %s1148 = sshll.u32 %s1138, 4
          %s1149 = int_to_ptr.vmem [resolvable:$true] %s1148
          %1154 = dma.vmem_to_hbm [thread:$0]  %s1149, 1024, %s1147, %s1135, 256, 256, 16
        $region68: #{tpu_custom_call.1} parent=63 // pred_fallthru
          _
      $region64: #{tpu_custom_call.1} parent=5 // pred_fallthru
        _
      %p1155 = scmp.le.s32.totalorder 2, %s20
      // Predicated region
      $region69: #{tpu_custom_call.1} parent=5 // pred_check
        %p1156 = pneg %p1155
      $region70: #{tpu_custom_call.1} parent=5 // pred_check_branch
        %1158 = sbr.rel (%p1156) target = $region72
      $region71: #{tpu_custom_call.1} parent=5 // pred_region
        %s1159 = ssub.s32 %s20, 2
        // Predicated region
        $region73: #{tpu_custom_call.1} parent=71 // pred_check
          %p1160 = pneg %p285
        $region74: #{tpu_custom_call.1} parent=71 // pred_check_branch
          %1162 = sbr.rel (%p1160) target = $region76
        $region75: #{tpu_custom_call.1} parent=71 // pred_region
          %s1163 = sand.u32 %s270, 1
          %s1164 = scalar_lea.sflag [#allocation3], %s1163
          %s1165 = sand.u32 %s270, 1
          %s1166 = smul.addr %s1165, 64
          %s1167 = scalar_lea.vmem [#allocation2], %s1166
          %1168 = dma.done %s1164, 1024
        $region76: #{tpu_custom_call.1} parent=71 // pred_fallthru
          _
      $region72: #{tpu_custom_call.1} parent=5 // pred_fallthru
        _
    $region6: #{tpu_custom_call.1} parent=1 // loop_footer
      %s24 = sadd.s32 1, %s20
    $region7: #{tpu_custom_call.1} parent=1 // loop_footer_branch
      %19 = sbr.rel target = $region3
    $region8: #{tpu_custom_call.1} parent=1 // loop_exit
      _
    %1169 = vsyncpa [#allocation3], 1
    %s1170 = scalar_lea.sflag [#allocation3], 1
    %1171 = vsyncpa %s1170, 1

</llo_original>
